<compile_context>
chip_gen: v6e
topology: v6e:2x2x1
jax: 0.10.0
libtpu: 0.0.40
codegen_flags: <defaults>
</compile_context>

<pallas_src>
import functools

import jax
import jax.numpy as jnp
import numpy as np
from jax.experimental import pallas as pl
from jax.experimental.pallas import tpu as pltpu
from scipy.optimize import linear_sum_assignment

COST_PROB = 1.0
COST_HEAT = 1.0


def _cost_kernel(p_ref, h_ref, g_ref, c_ref, *, cost_prob, cost_heat):
    # Blocks: p (TB, Q, 1), h (TB, Q, D), g (TB, D, Gp), c (TB, Q, Gp)
    h = h_ref[...]
    g = g_ref[...]
    p = p_ref[...]
    # Single deliberate upcast point (no-op for f32 inputs).
    if h.dtype != jnp.float32:
        h = h.astype(jnp.float32)
    if g.dtype != jnp.float32:
        g = g.astype(jnp.float32)
    if p.dtype != jnp.float32:
        p = p.astype(jnp.float32)

    tb, q, d = h.shape
    gp = g.shape[-1]

    # L1 cdist, unrolled over the tiny coordinate dim D.  All VPU work stays
    # lane-dense on the (Q, Gp) slab (G padded up to a multiple of 128 lanes);
    # no (Q, G, D) broadcast intermediate, no cross-lane reduction.
    cost_h = jnp.zeros((tb, q, gp), jnp.float32)
    for k in range(d):
        cost_h = cost_h + jnp.abs(h[:, :, k:k + 1] - g[:, k:k + 1, :])

    # prob cost: 1 - prob[:, -1], broadcast across all gt columns (lanes).
    cost_p = 1.0 - p                                   # (TB, Q, 1)

    c_ref[...] = cost_heat * cost_h + cost_prob * cost_p


def _pick_tb(B):
    # Amortize per-grid-step overhead by batching several B per step, but keep at
    # least 2 grid steps when possible so both v7x TensorCores are used.
    if B >= 4 and B % 2 == 0:
        return B // 2
    return 1


def compute_cost_matrices(prob, heat, gt, cost_prob=COST_PROB, cost_heat=COST_HEAT):
    B, Q, NC = prob.shape
    _, G, D = gt.shape
    Gp = ((G + 127) // 128) * 128                       # lane-dense padded gt count

    # Only the last class column is used by the matcher -> slice before the DMA.
    prob_last = prob[..., -1:]                          # (B, Q, 1)

    # Pre-transpose gt to (B, D, G) and pad the gt axis to Gp lanes.
    gt_t = jnp.transpose(gt, (0, 2, 1))                 # (B, D, G)
    gt_t = jnp.pad(gt_t, ((0, 0), (0, 0), (0, Gp - G)), constant_values=-1.0)

    tb = _pick_tb(B)
    grid = (B // tb,)

    kernel = functools.partial(
        _cost_kernel, cost_prob=float(cost_prob), cost_heat=float(cost_heat)
    )

    grid_spec = pltpu.PrefetchScalarGridSpec(
        num_scalar_prefetch=0,
        grid=grid,
        in_specs=[
            pl.BlockSpec((tb, Q, 1), lambda i: (i, 0, 0)),    # prob[..., -1:]
            pl.BlockSpec((tb, Q, D), lambda i: (i, 0, 0)),    # heat
            pl.BlockSpec((tb, D, Gp), lambda i: (i, 0, 0)),   # gt (transposed, padded)
        ],
        out_specs=pl.BlockSpec((tb, Q, Gp), lambda i: (i, 0, 0)),
    )

    c_pad = pl.pallas_call(
        kernel,
        out_shape=jax.ShapeDtypeStruct((B, Q, Gp), jnp.float32),
        grid_spec=grid_spec,
        compiler_params=pltpu.CompilerParams(dimension_semantics=("parallel",)),
    )(prob_last, heat, gt_t)

    # gt validity mask: trivially cheap, done in plain XLA (keeps the kernel to a
    # single lane-dense output; no masked (1, G) partial stores per grid step).
    mask = jnp.all(gt != -1.0, axis=-1)                 # (B, G) bool

    return c_pad[:, :, :G], mask


def hungarian_matcher(prob, heat, gt, cost_prob=COST_PROB, cost_heat=COST_HEAT):
    """Full equivalent of HungarianMatcher.forward (Pallas cost + host-side Hungarian)."""
    C, mask = compute_cost_matrices(prob, heat, gt, cost_prob, cost_heat)
    jax.block_until_ready((C, mask))
    C_np = np.asarray(jax.device_get(C))
    mask_np = np.asarray(jax.device_get(mask)).astype(bool)

    indices = []
    for b in range(C_np.shape[0]):
        valid_cols = np.nonzero(mask_np[b])[0]
        # Column selection here mirrors the reference's `gt_y = gt_y[mask]` compaction,
        # so col_ind indexes the *compacted* gt exactly as the PyTorch module does
        # (also correct if invalid rows are not a trailing suffix).
        Cb = C_np[b][:, valid_cols]
        # TODO(synk): linear_sum_assignment is a sequential host algorithm (reference
        # calls .cpu()); no clean Pallas equivalent, so it stays on host via scipy.
        row_ind, col_ind = linear_sum_assignment(Cb)
        indices.append(
            (np.asarray(row_ind, dtype=np.int64), np.asarray(col_ind, dtype=np.int64))
        )
    return indices


if __name__ == "__main__":
    key = jax.random.PRNGKey(0)
    B, Q, D, NC, G = 2, 8, 2, 3, 8  # batch, num_query, coord dim, num_classes, max gt

    k1, k2, k3 = jax.random.split(key, 3)
    prob = jax.nn.softmax(jax.random.normal(k1, (B, Q, NC), jnp.float32), axis=-1)
    heat = jax.random.uniform(k2, (B, Q, D), jnp.float32)

    gt = jax.random.uniform(k3, (B, G, D), jnp.float32)
    # Pad some gt rows with -1 (invalid), as the reference module expects.
    gt = gt.at[0, 5:].set(-1.0)
    gt = gt.at[1, 6:].set(-1.0)

    # Run the Pallas cost-matrix kernel and block on its outputs.
    C, mask = compute_cost_matrices(prob, heat, gt)
    jax.block_until_ready((C, mask))

    # Full matcher (Pallas kernel + host-side Hungarian assignment).
    indices = hungarian_matcher(prob, heat, gt)

    # Sanity checks against a pure-numpy reference of the cost matrix.
    heat_np, gt_np, prob_np = map(np.asarray, (heat, gt, prob))
    C_np, mask_np = np.asarray(C), np.asarray(mask)
    for b in range(B):
        cost_ref = np.abs(heat_np[b][:, None, :] - gt_np[b][None, :, :]).sum(-1)
        cost_ref = COST_HEAT * cost_ref + COST_PROB * (1.0 - prob_np[b][:, -1])[:, None]
        np.testing.assert_allclose(C_np[b], cost_ref, rtol=1e-5, atol=1e-5)
        mask_ref = np.all(gt_np[b] != -1.0, axis=-1)
        np.testing.assert_array_equal(mask_np[b], mask_ref)
        n_valid = int(mask_ref.sum())
        assert indices[b][0].shape == indices[b][1].shape == (min(Q, n_valid),)

    print("KERNEL_OK")
</pallas_src>

<mosaic_0001>
module attributes {stable_mosaic.version = 11 : i64} {
  func.func @_cost_kernel(%arg0: i32, %arg1: memref<1x8x1xf32, #tpu.memory_space<vmem>>, %arg2: memref<1x8x2xf32, #tpu.memory_space<vmem>>, %arg3: memref<1x2x128xf32, #tpu.memory_space<vmem>>, %arg4: memref<1x8x128xf32, #tpu.memory_space<vmem>>) attributes {dimension_semantics = [#tpu.dimension_semantics<parallel>], iteration_bounds = array<i64: 2>, scalar_prefetch = 0 : i64, scratch_operands = 0 : i64, tpu.core_type = #tpu.core_type<tc>, window_params = [{transform_indices = @transform_0, window_bounds = array<i64: 1, 8, 1>}, {transform_indices = @transform_1, window_bounds = array<i64: 1, 8, 2>}, {transform_indices = @transform_2, window_bounds = array<i64: 1, 2, 128>}, {transform_indices = @transform_3, window_bounds = array<i64: 1, 8, 128>}]} {
    %c0 = arith.constant 0 : index
    %c0_0 = arith.constant 0 : index
    %c0_1 = arith.constant 0 : index
    %0 = vector.load %arg2[%c0, %c0_0, %c0_1] : memref<1x8x2xf32, #tpu.memory_space<vmem>>, vector<1x8x2xf32>
    %c0_2 = arith.constant 0 : index
    %c0_3 = arith.constant 0 : index
    %c0_4 = arith.constant 0 : index
    %1 = vector.load %arg3[%c0_2, %c0_3, %c0_4] : memref<1x2x128xf32, #tpu.memory_space<vmem>>, vector<1x2x128xf32>
    %c0_5 = arith.constant 0 : index
    %c0_6 = arith.constant 0 : index
    %c0_7 = arith.constant 0 : index
    %2 = vector.load %arg1[%c0_5, %c0_6, %c0_7] : memref<1x8x1xf32, #tpu.memory_space<vmem>>, vector<1x8x1xf32>
    %cst = arith.constant 0.000000e+00 : f32
    %3 = vector.broadcast %cst : f32 to vector<1x8x128xf32>
    %4 = vector.extract_strided_slice %0 {offsets = [0, 0, 0], sizes = [1, 8, 1], strides = [1, 1, 1]} : vector<1x8x2xf32> to vector<1x8x1xf32>
    %5 = vector.extract_strided_slice %1 {offsets = [0, 0, 0], sizes = [1, 1, 128], strides = [1, 1, 1]} : vector<1x2x128xf32> to vector<1x1x128xf32>
    %6 = vector.broadcast %4 : vector<1x8x1xf32> to vector<1x8x128xf32>
    %7 = vector.broadcast %5 : vector<1x1x128xf32> to vector<1x8x128xf32>
    %8 = arith.subf %6, %7 : vector<1x8x128xf32>
    %9 = math.absf %8 : vector<1x8x128xf32>
    %10 = arith.addf %3, %9 : vector<1x8x128xf32>
    %11 = vector.extract_strided_slice %0 {offsets = [0, 0, 1], sizes = [1, 8, 1], strides = [1, 1, 1]} : vector<1x8x2xf32> to vector<1x8x1xf32>
    %12 = vector.extract_strided_slice %1 {offsets = [0, 1, 0], sizes = [1, 1, 128], strides = [1, 1, 1]} : vector<1x2x128xf32> to vector<1x1x128xf32>
    %13 = vector.broadcast %11 : vector<1x8x1xf32> to vector<1x8x128xf32>
    %14 = vector.broadcast %12 : vector<1x1x128xf32> to vector<1x8x128xf32>
    %15 = arith.subf %13, %14 : vector<1x8x128xf32>
    %16 = math.absf %15 : vector<1x8x128xf32>
    %17 = arith.addf %10, %16 : vector<1x8x128xf32>
    %cst_8 = arith.constant 1.000000e+00 : f32
    %18 = vector.broadcast %cst_8 : f32 to vector<1x8x1xf32>
    %19 = arith.subf %18, %2 : vector<1x8x1xf32>
    %cst_9 = arith.constant 1.000000e+00 : f32
    %20 = vector.broadcast %cst_9 : f32 to vector<1x8x128xf32>
    %21 = arith.mulf %20, %17 : vector<1x8x128xf32>
    %cst_10 = arith.constant 1.000000e+00 : f32
    %22 = vector.broadcast %cst_10 : f32 to vector<1x8x1xf32>
    %23 = arith.mulf %22, %19 : vector<1x8x1xf32>
    %24 = vector.broadcast %23 : vector<1x8x1xf32> to vector<1x8x128xf32>
    %25 = arith.addf %21, %24 : vector<1x8x128xf32>
    %c0_11 = arith.constant 0 : index
    %c0_12 = arith.constant 0 : index
    %c0_13 = arith.constant 0 : index
    %26 = vector.load %arg4[%c0_11, %c0_12, %c0_13] : memref<1x8x128xf32, #tpu.memory_space<vmem>>, vector<1x8x128xf32>
    tpu.vector_store %arg4[%c0_11, %c0_12, %c0_13], %25 {strides = array<i32>} : memref<1x8x128xf32, #tpu.memory_space<vmem>>, vector<1x8x128xf32>,
    return
  }
  func.func @transform_0(%arg0: i32) -> (i32, i32, i32) {
    %c0_i32 = arith.constant 0 : i32
    %c0_i32_0 = arith.constant 0 : i32
    %c0_i32_1 = arith.constant 0 : i32
    return %arg0, %c0_i32, %c0_i32_0 : i32, i32, i32
  }
  func.func @transform_1(%arg0: i32) -> (i32, i32, i32) {
    %c0_i32 = arith.constant 0 : i32
    %c0_i32_0 = arith.constant 0 : i32
    %c0_i32_1 = arith.constant 0 : i32
    return %arg0, %c0_i32, %c0_i32_0 : i32, i32, i32
  }
  func.func @transform_2(%arg0: i32) -> (i32, i32, i32) {
    %c0_i32 = arith.constant 0 : i32
    %c0_i32_0 = arith.constant 0 : i32
    %c0_i32_1 = arith.constant 0 : i32
    return %arg0, %c0_i32, %c0_i32_0 : i32, i32, i32
  }
  func.func @transform_3(%arg0: i32) -> (i32, i32, i32) {
    %c0_i32 = arith.constant 0 : i32
    %c0_i32_0 = arith.constant 0 : i32
    %c0_i32_1 = arith.constant 0 : i32
    return %arg0, %c0_i32, %c0_i32_0 : i32, i32, i32
  }
}

</mosaic_0001>

<llo_original>
// kernel: tpu_custom_call.1
$region0: #{tpu_custom_call.1}
  #allocation0 [shape = 'u32[]', space=smem, size = 0x4, offset = 0x4, fixed_abs, tag = 'smem constant byte address 0x4 - core index']
  #allocation1 [shape = 'u32[144,128]{1,0:T(1,128)}', space=vmem, size = 0x12000, scoped, tag = 'internal scratch']
  %s0 = inlined_call_operand.vmem [shape: f32[2,8,1], index: 0, kind: input, shape index: {}]
  %s1 = inlined_call_operand.vmem [shape: f32[2,8,2], index: 1, kind: input, shape index: {}]
  %s2 = inlined_call_operand.vmem [shape: f32[2,2,128], index: 2, kind: input, shape index: {}]
  %s3 = inlined_call_operand.hbm [shape: f32[2,8,128], index: 3, kind: output, shape index: {}]
  %s4 = sld [smem:[#allocation0]]
  $region45: #{tpu_custom_call.1} parent=0
    _
  %s6 = ssub.s32 1, %s4
  %s7 = scalar_select 0, %s6, %s4
  $region1: #{tpu_custom_call.1} parent=0
    #allocation2 [shape = 'u8[8192]{0}', space=vmem, size = 0x2000, scoped, tag = 'output window, operand 0']
    #allocation3 [shape = 's32[2]{0}', space=sflag, size = 0x8, scoped, tag = 'scoped memory for tpu_custom_call.1']
    %8 = vsyncpa [#allocation3], 0
    %s9 = scalar_lea.sflag [#allocation3], 1
    %10 = vsyncpa %s9, 0
    loop: start=0, step=1, limit=4
    $region2: #{tpu_custom_call.1} parent=1 // loop_pre_header
      _
    $region3: #{tpu_custom_call.1} parent=1 // loop_header
      %s12 = sphi 0, %s16
      %p13 = scmp.ge.s32.totalorder %s12, 4
      %s22 = sphi 0, %s24
      %s25 = sphi 0, %s22
      %s26 = sphi 0, %s25
      %s42 = sphi 0, %s26
      %s48 = sphi 0, %s50
      %s51 = sphi 0, %s48
      %s52 = sphi 0, %s51
      %s68 = sphi 0, %s52
      %s74 = sphi 0, %s76
      %s77 = sphi 0, %s74
      %s78 = sphi 0, %s77
      %s94 = sphi 0, %s78
      %s100 = sphi 0, %s102
      %s103 = sphi 0, %s100
      %s104 = sphi 0, %s103
      %s120 = sphi 0, %s104
    $region4: #{tpu_custom_call.1} parent=1 // loop_header_branch
      %15 = sbr.rel (%p13) target = $region8
    $region5: #{tpu_custom_call.1} parent=1 // loop_body
      %s17 = ssub.s32 %s12, 1
      %s18 = ssub.s32 %s12, 2
      %s19 = sadd.s32 %s12, 1
      %s20 = ssub.s32 %s12, %s19
      %p21 = scmp.eq.s32.totalorder %s20, 0
      %s23 = sadd.s32 %s22, 1
      %s24 = scalar_select %p21, %s22, %s23
      %p27 = pneg %p21
      %p28 = scmp.eq.s32.totalorder %s12, 1
      %p29 = por %p27, %p28
      %p30 = scmp.ne.s32.totalorder %s22, %s25
      %p31 = scmp.eq.s32.totalorder %s12, 0
      %p32 = por %p30, %p31
      %p33 = scmp.ne.s32.totalorder %s22, %s25
      %p34 = scmp.eq.s32.totalorder %s17, 1
      %p35 = por %p33, %p34
      %p36 = scmp.ne.s32.totalorder %s25, %s26
      %p37 = scmp.eq.s32.totalorder %s17, 0
      %p38 = por %p36, %p37
      %p39 = scmp.ne.s32.totalorder %s25, %s26
      %p40 = scmp.eq.s32.totalorder %s18, 1
      %p41 = por %p39, %p40
      %p43 = scmp.ne.s32.totalorder %s26, %s42
      %p44 = scmp.eq.s32.totalorder %s18, 0
      %p45 = por %p43, %p44
      %s46 = ssub.s32 %s12, %s19
      %p47 = scmp.eq.s32.totalorder %s46, 0
      %s49 = sadd.s32 %s48, 1
      %s50 = scalar_select %p47, %s48, %s49
      %p53 = pneg %p47
      %p54 = scmp.eq.s32.totalorder %s12, 1
      %p55 = por %p53, %p54
      %p56 = scmp.ne.s32.totalorder %s48, %s51
      %p57 = scmp.eq.s32.totalorder %s12, 0
      %p58 = por %p56, %p57
      %p59 = scmp.ne.s32.totalorder %s48, %s51
      %p60 = scmp.eq.s32.totalorder %s17, 1
      %p61 = por %p59, %p60
      %p62 = scmp.ne.s32.totalorder %s51, %s52
      %p63 = scmp.eq.s32.totalorder %s17, 0
      %p64 = por %p62, %p63
      %p65 = scmp.ne.s32.totalorder %s51, %s52
      %p66 = scmp.eq.s32.totalorder %s18, 1
      %p67 = por %p65, %p66
      %p69 = scmp.ne.s32.totalorder %s52, %s68
      %p70 = scmp.eq.s32.totalorder %s18, 0
      %p71 = por %p69, %p70
      %s72 = ssub.s32 %s12, %s19
      %p73 = scmp.eq.s32.totalorder %s72, 0
      %s75 = sadd.s32 %s74, 1
      %s76 = scalar_select %p73, %s74, %s75
      %p79 = pneg %p73
      %p80 = scmp.eq.s32.totalorder %s12, 1
      %p81 = por %p79, %p80
      %p82 = scmp.ne.s32.totalorder %s74, %s77
      %p83 = scmp.eq.s32.totalorder %s12, 0
      %p84 = por %p82, %p83
      %p85 = scmp.ne.s32.totalorder %s74, %s77
      %p86 = scmp.eq.s32.totalorder %s17, 1
      %p87 = por %p85, %p86
      %p88 = scmp.ne.s32.totalorder %s77, %s78
      %p89 = scmp.eq.s32.totalorder %s17, 0
      %p90 = por %p88, %p89
      %p91 = scmp.ne.s32.totalorder %s77, %s78
      %p92 = scmp.eq.s32.totalorder %s18, 1
      %p93 = por %p91, %p92
      %p95 = scmp.ne.s32.totalorder %s78, %s94
      %p96 = scmp.eq.s32.totalorder %s18, 0
      %p97 = por %p95, %p96
      %s98 = ssub.s32 %s12, %s19
      %p99 = scmp.eq.s32.totalorder %s98, 0
      %s101 = sadd.s32 %s100, 1
      %s102 = scalar_select %p99, %s100, %s101
      %p105 = pneg %p99
      %p106 = scmp.eq.s32.totalorder %s12, 1
      %p107 = por %p105, %p106
      %p108 = scmp.ne.s32.totalorder %s100, %s103
      %p109 = scmp.eq.s32.totalorder %s12, 0
      %p110 = por %p108, %p109
      %p111 = scmp.ne.s32.totalorder %s100, %s103
      %p112 = scmp.eq.s32.totalorder %s17, 1
      %p113 = por %p111, %p112
      %p114 = scmp.ne.s32.totalorder %s103, %s104
      %p115 = scmp.eq.s32.totalorder %s17, 0
      %p116 = por %p114, %p115
      %p117 = scmp.ne.s32.totalorder %s103, %s104
      %p118 = scmp.eq.s32.totalorder %s18, 1
      %p119 = por %p117, %p118
      %p121 = scmp.ne.s32.totalorder %s104, %s120
      %p122 = scmp.eq.s32.totalorder %s18, 0
      %p123 = por %p121, %p122
      %p124 = scmp.le.s32.totalorder 1, %s12
      %p125 = scmp.lt.s32.totalorder %s12, 3
      %p126 = pnand %p124, %p125
      %p127 = pneg %p126
      // Predicated region
      $region9: #{tpu_custom_call.1} parent=5 // pred_check
        _
      $region10: #{tpu_custom_call.1} parent=5 // pred_check_branch
        %129 = sbr.rel (%p126) target = $region12
      $region11: #{tpu_custom_call.1} parent=5 // pred_region
        %s130 = ssub.s32 %s12, 1
      $region12: #{tpu_custom_call.1} parent=5 // pred_fallthru
        _
      %p131 = scmp.lt.s32.totalorder %s12, 2
      // Predicated region
      $region13: #{tpu_custom_call.1} parent=5 // pred_check
        %p132 = pneg %p131
      $region14: #{tpu_custom_call.1} parent=5 // pred_check_branch
        %134 = sbr.rel (%p132) target = $region16
      $region15: #{tpu_custom_call.1} parent=5 // pred_region
        // Predicated region
        $region17: #{tpu_custom_call.1} parent=15 // pred_check
          %p135 = pneg %p32
        $region18: #{tpu_custom_call.1} parent=15 // pred_check_branch
          %137 = sbr.rel (%p135) target = $region20
        $region19: #{tpu_custom_call.1} parent=15 // pred_region
          %p138 = scmp.lt.s32.totalorder %s12, 1
          %s139 = scalar_select %p138, %s12, 1
          %s140 = smul.addr %s139, 8
          %s141 = scalar_lea.vmem %s0, %s140
        $region20: #{tpu_custom_call.1} parent=15 // pred_fallthru
          _
        // Predicated region
        $region21: #{tpu_custom_call.1} parent=15 // pred_check
          %p142 = pneg %p58
        $region22: #{tpu_custom_call.1} parent=15 // pred_check_branch
          %144 = sbr.rel (%p142) target = $region24
        $region23: #{tpu_custom_call.1} parent=15 // pred_region
          %p145 = scmp.lt.s32.totalorder %s12, 1
          %s146 = scalar_select %p145, %s12, 1
          %s147 = smul.addr %s146, 8
          %s148 = scalar_lea.vmem %s1, %s147
        $region24: #{tpu_custom_call.1} parent=15 // pred_fallthru
          _
        // Predicated region
        $region25: #{tpu_custom_call.1} parent=15 // pred_check
          %p149 = pneg %p84
        $region26: #{tpu_custom_call.1} parent=15 // pred_check_branch
          %151 = sbr.rel (%p149) target = $region28
        $region27: #{tpu_custom_call.1} parent=15 // pred_region
          %p152 = scmp.lt.s32.totalorder %s12, 1
          %s153 = scalar_select %p152, %s12, 1
          %s154 = smul.addr %s153, 2
          %s155 = scalar_lea.vmem %s2, %s154
        $region28: #{tpu_custom_call.1} parent=15 // pred_fallthru
          _
      $region16: #{tpu_custom_call.1} parent=5 // pred_fallthru
        _
      %p156 = scmp.le.s32.totalorder 1, %s12
      %p157 = scmp.lt.s32.totalorder %s12, 3
      %p158 = pnand %p156, %p157
      %p159 = pneg %p158
      // Predicated region
      $region29: #{tpu_custom_call.1} parent=5 // pred_check
        _
      $region30: #{tpu_custom_call.1} parent=5 // pred_check_branch
        %161 = sbr.rel (%p158) target = $region32
      $region31: #{tpu_custom_call.1} parent=5 // pred_region
        %s162 = ssub.s32 %s12, 1
        %p163 = scmp.lt.s32.totalorder %s17, 1
        %s164 = scalar_select %p163, %s17, 1
        %s165 = smul.addr %s164, 8
        %s166 = scalar_lea.vmem %s0, %s165
        %p167 = pneg %p38
        %p168 = pneg %p35
        %p169 = scmp.lt.s32.totalorder %s17, 1
        %s170 = scalar_select %p169, %s17, 1
        %s171 = smul.addr %s170, 8
        %s172 = scalar_lea.vmem %s1, %s171
        %p173 = pneg %p64
        %p174 = pneg %p61
        %p175 = scmp.lt.s32.totalorder %s17, 1
        %s176 = scalar_select %p175, %s17, 1
        %s177 = smul.addr %s176, 2
        %s178 = scalar_lea.vmem %s2, %s177
        %p179 = pneg %p90
        %p180 = pneg %p87
        %p181 = pneg %p116
        %p182 = pneg %p113
        %s183 = sand.u32 %s103, 1
        %s184 = scalar_lea.sflag [#allocation3], %s183
        %s185 = sand.u32 %s103, 1
        %s186 = smul.addr %s185, 8
        %s187 = scalar_lea.vmem [#allocation2], %s186
        %p188 = scmp.lt.s32.totalorder %s17, 1
        %s189 = scalar_select %p188, %s17, 1
        %s190 = smul.addr %s189, 8
        %s191 = scalar_lea.vmem %s0, %s190
        %p192 = scmp.lt.s32.totalorder %s17, 1
        %s193 = scalar_select %p192, %s17, 1
        %s194 = smul.addr %s193, 8
        %s195 = scalar_lea.vmem %s1, %s194
        %p196 = scmp.lt.s32.totalorder %s17, 1
        %s197 = scalar_select %p196, %s17, 1
        %s198 = smul.addr %s197, 2
        %s199 = scalar_lea.vmem %s2, %s198
        %v200 = vld [vmem:[%s195] sm:$0xff]
        %v201 = vld [vmem:[%s199] sm:$0x3]
        %v202 = vld [vmem:[%s191] sm:$0xff]
        %204 = vset.pattern.permute.xlu0 0
        %205 = vperm.xlu0 %204, %v200
        %v206 = vpop.permute.xlu0 %205
        %v208 = vlaneseq
        %v209 = vshrl.u32 %v208, 7
        %v210 = vsub.s32 0, %v209
        %v211 = vrot.slane %v201, %v210
        %v212 = vsub.f32 %v206, %v211
        %v213 = vand.u32 2147483647, %v212
        %v214 = vadd.f32 %v213, 0.0
        %215 = vset.pattern.permute.xlu0 1
        %216 = vperm.xlu0 %215, %v200
        %v217 = vpop.permute.xlu0 %216
        %v219 = vlaneseq
        %v220 = vshrl.u32 %v219, 7
        %v221 = vsub.s32 1, %v220
        %v222 = vrot.slane %v201, %v221
        %v223 = vsub.f32 %v217, %v222
        %v224 = vand.u32 2147483647, %v223
        %v225 = vadd.f32 %v214, %v224
        %v226 = vsub.f32 1.0, %v202
        %228 = vset.pattern.permute.xlu0 0
        %229 = vperm.xlu0 %228, %v226
        %v230 = vpop.permute.xlu0 %229
        %v232 = vadd.f32 %v225, %v230
        %233 = vst [vmem:[%s187] sm:$0xff] %v232
        %s234 = sand.u32 %s103, 1
        %s235 = scalar_lea.sflag [#allocation3], %s234
        %s236 = sand.u32 %s103, 1
        %s237 = smul.addr %s236, 8
        %s238 = scalar_lea.vmem [#allocation2], %s237
        // Predicated region
        $region33: #{tpu_custom_call.1} parent=31 // pred_check
          %p239 = pneg %p113
        $region34: #{tpu_custom_call.1} parent=31 // pred_check_branch
          %241 = sbr.rel (%p239) target = $region36
        $region35: #{tpu_custom_call.1} parent=31 // pred_region
          %s243 = ssub.s32 128, 128
          %244 = vsyncadd %s235, %s243
          %s245 = smul.addr %s17, 128
          %s246 = scalar_lea.hbm %s3, %s245
          %s248 = sshll.u32 %s238, 4
          %s249 = int_to_ptr.vmem [resolvable:$true] %s248
          %251 = dma.vmem_to_hbm [thread:$0]  %s249, 128, %s246, %s235
        $region36: #{tpu_custom_call.1} parent=31 // pred_fallthru
          _
      $region32: #{tpu_custom_call.1} parent=5 // pred_fallthru
        _
      %p252 = scmp.le.s32.totalorder 2, %s12
      // Predicated region
      $region37: #{tpu_custom_call.1} parent=5 // pred_check
        %p253 = pneg %p252
      $region38: #{tpu_custom_call.1} parent=5 // pred_check_branch
        %255 = sbr.rel (%p253) target = $region40
      $region39: #{tpu_custom_call.1} parent=5 // pred_region
        %s256 = ssub.s32 %s12, 2
        // Predicated region
        $region41: #{tpu_custom_call.1} parent=39 // pred_check
          %p257 = pneg %p119
        $region42: #{tpu_custom_call.1} parent=39 // pred_check_branch
          %259 = sbr.rel (%p257) target = $region44
        $region43: #{tpu_custom_call.1} parent=39 // pred_region
          %s260 = sand.u32 %s104, 1
          %s261 = scalar_lea.sflag [#allocation3], %s260
          %s262 = sand.u32 %s104, 1
          %s263 = smul.addr %s262, 8
          %s264 = scalar_lea.vmem [#allocation2], %s263
          %265 = dma.done %s261, 128
        $region44: #{tpu_custom_call.1} parent=39 // pred_fallthru
          _
      $region40: #{tpu_custom_call.1} parent=5 // pred_fallthru
        _
    $region6: #{tpu_custom_call.1} parent=1 // loop_footer
      %s16 = sadd.s32 1, %s12
    $region7: #{tpu_custom_call.1} parent=1 // loop_footer_branch
      %11 = sbr.rel target = $region3
    $region8: #{tpu_custom_call.1} parent=1 // loop_exit
      _
    %266 = vsyncpa [#allocation3], 1
    %s267 = scalar_lea.sflag [#allocation3], 1
    %268 = vsyncpa %s267, 1

</llo_original>
